<compile_context>
chip_gen: v7x
topology: tpu7x:2x2x1
jax: 0.10.0
libtpu: 0.0.40
codegen_flags: <defaults>
</compile_context>

<pallas_src>
import math

import jax
import jax.numpy as jnp
from jax import lax
from jax.experimental import pallas as pl
from jax.experimental.pallas import tpu as pltpu


def _mem_kernel(x_ref, w_ref, wt_ref, y_ref, loss_ref):
    x = x_ref[...].astype(jnp.float32)      # (C, tm)  raw input columns
    w = w_ref[...].astype(jnp.float32)      # (D, C)   memory bank (resident)
    wt = wt_ref[...].astype(jnp.float32)    # (C, D)   memory bank^T (resident)

    C = x.shape[0]
    D = w.shape[0]
    tm = x.shape[1]

    # --- F.normalize(input, p=1, dim=channel): channel axis is sublanes.
    #     EUP approx reciprocal frees VALU slots (review item).
    l1 = jnp.sum(jnp.abs(x), axis=0, keepdims=True)                  # (1, tm)
    xn = x * pl.reciprocal(jnp.maximum(l1, 1e-12), approx=True)      # (C, tm)

    # --- score = F.linear(query, W); softmax over mem_dim (f32 throughout) ---
    score = jnp.dot(w, xn, preferred_element_type=jnp.float32)       # (D, tm)
    score = score - jnp.max(score, axis=0, keepdims=True)
    e = jnp.exp(score)
    p = e * pl.reciprocal(jnp.sum(e, axis=0, keepdims=True), approx=True)

    # --- top-2 memory slots via int32 iota + one-hot masks (first-occurrence
    #     tie-break, matching torch.topk) ---
    rowi = lax.broadcasted_iota(jnp.int32, p.shape, 0)               # (D, tm)
    m1 = jnp.max(p, axis=0, keepdims=True)
    idx1 = jnp.min(jnp.where(p == m1, rowi, D), axis=0, keepdims=True)
    oh1 = rowi == idx1
    p2 = jnp.where(oh1, -jnp.inf, p)
    m2 = jnp.max(p2, axis=0, keepdims=True)
    idx2 = jnp.min(jnp.where(p2 == m2, rowi, D), axis=0, keepdims=True)
    oh2 = rowi == idx2

    # --- one fused weight-stationary MXU pass for mem / pos / neg ---
    rhs = jnp.concatenate(
        [p, oh1.astype(jnp.float32), oh2.astype(jnp.float32)], axis=1)  # (D, 3*tm)
    fused = jnp.dot(wt, rhs, preferred_element_type=jnp.float32)        # (C, 3*tm)
    mem = fused[:, :tm]
    pos = fused[:, tm:2 * tm]
    neg = fused[:, 2 * tm:]

    # --- output = cat([query, mem], feature dim): two unmasked lane-dense
    #     stores (last dim = tile_hw, a multiple of 128 or the full extent) ---
    y_ref[:C, :] = xn.astype(y_ref.dtype)
    y_ref[C:, :] = mem.astype(y_ref.dtype)

    # --- packed loss partials: row 0 = MSELoss(query, p) partial,
    #     row 1 = TripletMarginLoss hinge value; means taken in the wrapper ---
    g = jnp.sum((xn - p) ** 2, axis=0, keepdims=True)                   # (1, tm)
    eps = 1e-6  # F.pairwise_distance eps used inside TripletMarginLoss
    d_pos = jnp.sqrt(jnp.sum((xn - pos + eps) ** 2, axis=0, keepdims=True))
    d_neg = jnp.sqrt(jnp.sum((xn - neg + eps) ** 2, axis=0, keepdims=True))
    spr = jnp.maximum(d_pos - d_neg + 1.0, 0.0)                         # (1, tm)
    loss_ref[...] = jnp.concatenate([g, spr], axis=0).astype(loss_ref.dtype)


def _pick_tile(hw, c, d, vmem_budget_bytes=24 << 20, max_tile=8192):
    """Largest lane-dense (multiple-of-128) divisor of hw that fits a VMEM budget."""
    # Rough f32 bytes per lane column kept live in VMEM:
    #   double-buffered blocks: 2*(C in + 2C out + 2 loss) + in-kernel temps
    #   (xn, score/e/p, masks, fused (D,3tm) rhs and (C,3tm) result).
    bytes_per_col = 4 * (2 * (c + 2 * c + 2) + (4 * c + 8 * d))
    cap = max(128, min(max_tile, (vmem_budget_bytes // bytes_per_col) // 128 * 128))
    best = None
    t = 128
    while t <= min(hw, cap):
        if hw % t == 0:
            best = t
        t += 128
    return (best if best is not None else hw), bytes_per_col


@jax.jit
def mem_module_forward(x_nchw, weight):
    """x_nchw: (N, C, H, W) float32; weight: (mem_dim, fea_dim=C)."""
    N, C, H, W = x_nchw.shape
    D, Cw = weight.shape
    assert Cw == C, "weight fea_dim must match input channels"
    # PyTorch gather_loss (MSELoss(query, score)) only type-checks when
    # mem_dim == fea_dim; we reproduce that exact semantics.
    assert D == C, "gather_loss requires mem_dim == fea_dim (as in PyTorch)"

    HW = H * W
    M = N * HW
    tile_hw, bytes_per_col = _pick_tile(HW, C, D)
    n_tiles = HW // tile_hw if HW % tile_hw == 0 else 1

    # Explicit scoped-VMEM limit (v5e defaults to only 16 MiB; v7x physical
    # VMEM is 64 MiB, so stay well under that).
    vmem_limit = int(min(48 << 20, max(32 << 20, 2 * bytes_per_col * tile_hw)))

    # Free reshapes only -- no transposes, no extra HBM traffic.
    x3 = x_nchw.reshape(N, C, HW)
    w_t = weight.T   # tiny (C, D); pre-transposed once, resident in VMEM

    y3, loss = pl.pallas_call(
        _mem_kernel,
        out_shape=(
            jax.ShapeDtypeStruct((N, 2 * C, HW), jnp.float32),  # [query ; mem]
            jax.ShapeDtypeStruct((N, 2, HW), jnp.float32),      # packed loss partials
        ),
        grid_spec=pltpu.PrefetchScalarGridSpec(
            num_scalar_prefetch=0,
            grid=(N, n_tiles),
            in_specs=[
                pl.BlockSpec((None, C, tile_hw), lambda n, i: (n, 0, i)),  # query cols
                pl.BlockSpec((D, C), lambda n, i: (0, 0)),                 # memory bank
                pl.BlockSpec((C, D), lambda n, i: (0, 0)),                 # memory bank^T
            ],
            out_specs=[
                pl.BlockSpec((None, 2 * C, tile_hw), lambda n, i: (n, 0, i)),
                pl.BlockSpec((None, 2, tile_hw), lambda n, i: (n, 0, i)),
            ],
        ),
        compiler_params=pltpu.CompilerParams(
            # No cross-iteration state on either axis -> shard across TCs.
            dimension_semantics=("parallel", "parallel"),
            vmem_limit_bytes=vmem_limit,
        ),
    )(x3, weight, w_t)

    # Free reshape back to NCHW; finalize the loss means.
    y = y3.reshape(N, 2 * C, H, W)
    g_loss = jnp.sum(loss[:, 0, :]) / (M * C)   # MSELoss mean over M*C elements
    s_loss = jnp.sum(loss[:, 1, :]) / M         # TripletMarginLoss mean over M rows
    return y, g_loss, s_loss


if __name__ == "__main__":
    # Small shapes consistent with the module: fea_dim = channels.
    N, H, W = 2, 16, 16
    fea_dim = 32
    mem_dim = 32   # must equal fea_dim for gather_loss (MSE) to be well-formed

    key = jax.random.PRNGKey(0)
    k_x, k_w = jax.random.split(key)
    x = jax.random.normal(k_x, (N, fea_dim, H, W), dtype=jnp.float32)

    # MemoryUnit.reset_parameters: uniform(-stdv, stdv), stdv = 1/sqrt(fea_dim)
    stdv = 1.0 / math.sqrt(fea_dim)
    weight = jax.random.uniform(
        k_w, (mem_dim, fea_dim), minval=-stdv, maxval=stdv, dtype=jnp.float32
    )

    y, g_loss, s_loss = mem_module_forward(x, weight)
    jax.block_until_ready((y, g_loss, s_loss))

    assert y.shape == (N, 2 * fea_dim, H, W)
    assert jnp.isfinite(g_loss) and jnp.isfinite(s_loss)
    print("KERNEL_OK")
</pallas_src>

<mosaic_0001>
module attributes {stable_mosaic.version = 11 : i64} {
  func.func @_mem_kernel(%arg0: i32, %arg1: i32, %arg2: memref<1x32x256xf32, #tpu.memory_space<vmem>>, %arg3: memref<32x32xf32, #tpu.memory_space<vmem>>, %arg4: memref<32x32xf32, #tpu.memory_space<vmem>>, %arg5: memref<1x64x256xf32, #tpu.memory_space<vmem>>, %arg6: memref<1x2x256xf32, #tpu.memory_space<vmem>>) attributes {dimension_semantics = [#tpu.dimension_semantics<parallel>, #tpu.dimension_semantics<parallel>], iteration_bounds = array<i64: 2, 1>, scalar_prefetch = 0 : i64, scratch_operands = 0 : i64, tpu.core_type = #tpu.core_type<tc>, window_params = [{transform_indices = @transform_0, window_bounds = array<i64: 1, 32, 256>}, {pipeline_mode = #tpu.pipeline_mode<synchronous>, transform_indices = @transform_1, window_bounds = array<i64: 32, 32>}, {pipeline_mode = #tpu.pipeline_mode<synchronous>, transform_indices = @transform_2, window_bounds = array<i64: 32, 32>}, {transform_indices = @transform_3, window_bounds = array<i64: 1, 64, 256>}, {transform_indices = @transform_4, window_bounds = array<i64: 1, 2, 256>}]} {
    %c0 = arith.constant 0 : index
    %c0_0 = arith.constant 0 : index
    %c0_1 = arith.constant 0 : index
    %0 = vector.load %arg2[%c0, %c0_0, %c0_1] : memref<1x32x256xf32, #tpu.memory_space<vmem>>, vector<1x32x256xf32>
    %1 = vector.shape_cast %0 : vector<1x32x256xf32> to vector<32x256xf32>
    %c0_2 = arith.constant 0 : index
    %c0_3 = arith.constant 0 : index
    %2 = vector.load %arg3[%c0_2, %c0_3] : memref<32x32xf32, #tpu.memory_space<vmem>>, vector<32x32xf32>
    %c0_4 = arith.constant 0 : index
    %c0_5 = arith.constant 0 : index
    %3 = vector.load %arg4[%c0_4, %c0_5] : memref<32x32xf32, #tpu.memory_space<vmem>>, vector<32x32xf32>
    %4 = math.absf %1 : vector<32x256xf32>
    %cst = arith.constant dense<0.000000e+00> : vector<256xf32>
    %5 = vector.multi_reduction <add>, %4, %cst [0] : vector<32x256xf32> to vector<256xf32>
    %6 = vector.shape_cast %5 : vector<256xf32> to vector<1x256xf32>
    %cst_6 = arith.constant 9.99999996E-13 : f32
    %7 = vector.broadcast %cst_6 : f32 to vector<1x256xf32>
    %8 = arith.maximumf %6, %7 : vector<1x256xf32>
    %9 = tpu.reciprocal %8 {approx = true} : vector<1x256xf32> -> vector<1x256xf32>
    %10 = vector.broadcast %9 : vector<1x256xf32> to vector<32x256xf32>
    %11 = arith.mulf %1, %10 : vector<32x256xf32>
    %cst_7 = arith.constant dense<0.000000e+00> : vector<32x256xf32>
    %12 = tpu.matmul %2, %11, %cst_7 {dimension_numbers = #tpu.dot_dimension_numbers<[1], [0], [0], [1], [0, 0, 1, 1], [], []>} : vector<32x32xf32>, vector<32x256xf32>, vector<32x256xf32> -> vector<32x256xf32>
    %cst_8 = arith.constant dense<0xFF800000> : vector<256xf32>
    %13 = vector.multi_reduction <maximumf>, %12, %cst_8 [0] : vector<32x256xf32> to vector<256xf32>
    %14 = vector.shape_cast %13 : vector<256xf32> to vector<1x256xf32>
    %15 = vector.broadcast %14 : vector<1x256xf32> to vector<32x256xf32>
    %16 = arith.subf %12, %15 : vector<32x256xf32>
    %17 = math.exp %16 : vector<32x256xf32>
    %cst_9 = arith.constant dense<0.000000e+00> : vector<256xf32>
    %18 = vector.multi_reduction <add>, %17, %cst_9 [0] : vector<32x256xf32> to vector<256xf32>
    %19 = vector.shape_cast %18 : vector<256xf32> to vector<1x256xf32>
    %20 = tpu.reciprocal %19 {approx = true} : vector<1x256xf32> -> vector<1x256xf32>
    %21 = vector.broadcast %20 : vector<1x256xf32> to vector<32x256xf32>
    %22 = arith.mulf %17, %21 : vector<32x256xf32>
    %23 = tpu.iota {dimensions = array<i32: 0>} : vector<32x256xi32>
    %cst_10 = arith.constant dense<0xFF800000> : vector<256xf32>
    %24 = vector.multi_reduction <maximumf>, %22, %cst_10 [0] : vector<32x256xf32> to vector<256xf32>
    %25 = vector.shape_cast %24 : vector<256xf32> to vector<1x256xf32>
    %26 = vector.broadcast %25 : vector<1x256xf32> to vector<32x256xf32>
    %27 = arith.cmpf oeq, %22, %26 : vector<32x256xf32>
    %c32_i32 = arith.constant 32 : i32
    %28 = vector.broadcast %c32_i32 : i32 to vector<32x256xi32>
    %29 = arith.select %27, %23, %28 : vector<32x256xi1>, vector<32x256xi32>
    %cst_11 = arith.constant dense<2147483647> : vector<256xi32>
    %30 = vector.multi_reduction <minsi>, %29, %cst_11 [0] : vector<32x256xi32> to vector<256xi32>
    %31 = vector.shape_cast %30 : vector<256xi32> to vector<1x256xi32>
    %32 = vector.broadcast %31 : vector<1x256xi32> to vector<32x256xi32>
    %33 = arith.cmpi eq, %23, %32 : vector<32x256xi32>
    %cst_12 = arith.constant 0xFF800000 : f32
    %34 = vector.broadcast %cst_12 : f32 to vector<32x256xf32>
    %35 = arith.select %33, %34, %22 : vector<32x256xi1>, vector<32x256xf32>
    %cst_13 = arith.constant dense<0xFF800000> : vector<256xf32>
    %36 = vector.multi_reduction <maximumf>, %35, %cst_13 [0] : vector<32x256xf32> to vector<256xf32>
    %37 = vector.shape_cast %36 : vector<256xf32> to vector<1x256xf32>
    %38 = vector.broadcast %37 : vector<1x256xf32> to vector<32x256xf32>
    %39 = arith.cmpf oeq, %35, %38 : vector<32x256xf32>
    %c32_i32_14 = arith.constant 32 : i32
    %40 = vector.broadcast %c32_i32_14 : i32 to vector<32x256xi32>
    %41 = arith.select %39, %23, %40 : vector<32x256xi1>, vector<32x256xi32>
    %cst_15 = arith.constant dense<2147483647> : vector<256xi32>
    %42 = vector.multi_reduction <minsi>, %41, %cst_15 [0] : vector<32x256xi32> to vector<256xi32>
    %43 = vector.shape_cast %42 : vector<256xi32> to vector<1x256xi32>
    %44 = vector.broadcast %43 : vector<1x256xi32> to vector<32x256xi32>
    %45 = arith.cmpi eq, %23, %44 : vector<32x256xi32>
    %46 = arith.extui %33 : vector<32x256xi1> to vector<32x256xi32>
    %47 = arith.sitofp %46 : vector<32x256xi32> to vector<32x256xf32>
    %48 = arith.extui %45 : vector<32x256xi1> to vector<32x256xi32>
    %49 = arith.sitofp %48 : vector<32x256xi32> to vector<32x256xf32>
    %50 = tpu.concatenate %22, %47, %49 in 1 : vector<32x256xf32>, vector<32x256xf32>, vector<32x256xf32> -> vector<32x768xf32>
    %cst_16 = arith.constant dense<0.000000e+00> : vector<32x768xf32>
    %51 = tpu.matmul %3, %50, %cst_16 {dimension_numbers = #tpu.dot_dimension_numbers<[1], [0], [0], [1], [0, 0, 1, 1], [], []>} : vector<32x32xf32>, vector<32x768xf32>, vector<32x768xf32> -> vector<32x768xf32>
    %52 = vector.extract_strided_slice %51 {offsets = [0, 0], sizes = [32, 256], strides = [1, 1]} : vector<32x768xf32> to vector<32x256xf32>
    %53 = vector.extract_strided_slice %51 {offsets = [0, 256], sizes = [32, 256], strides = [1, 1]} : vector<32x768xf32> to vector<32x256xf32>
    %54 = vector.extract_strided_slice %51 {offsets = [0, 512], sizes = [32, 256], strides = [1, 1]} : vector<32x768xf32> to vector<32x256xf32>
    %c0_17 = arith.constant 0 : index
    %c0_18 = arith.constant 0 : index
    %c0_19 = arith.constant 0 : index
    %55 = vector.load %arg5[%c0_17, %c0_18, %c0_19] : memref<1x64x256xf32, #tpu.memory_space<vmem>>, vector<1x32x256xf32>
    %56 = vector.shape_cast %55 : vector<1x32x256xf32> to vector<32x256xf32>
    %57 = vector.shape_cast %11 : vector<32x256xf32> to vector<1x32x256xf32>
    tpu.vector_store %arg5[%c0_17, %c0_18, %c0_19], %57 {strides = array<i32>} : memref<1x64x256xf32, #tpu.memory_space<vmem>>, vector<1x32x256xf32>,
    %c0_20 = arith.constant 0 : index
    %c32 = arith.constant 32 : index
    %c0_21 = arith.constant 0 : index
    %58 = vector.load %arg5[%c0_20, %c32, %c0_21] : memref<1x64x256xf32, #tpu.memory_space<vmem>>, vector<1x32x256xf32>
    %59 = vector.shape_cast %58 : vector<1x32x256xf32> to vector<32x256xf32>
    %60 = vector.shape_cast %52 : vector<32x256xf32> to vector<1x32x256xf32>
    tpu.vector_store %arg5[%c0_20, %c32, %c0_21], %60 {strides = array<i32>} : memref<1x64x256xf32, #tpu.memory_space<vmem>>, vector<1x32x256xf32>,
    %61 = arith.subf %11, %22 : vector<32x256xf32>
    %62 = arith.mulf %61, %61 : vector<32x256xf32>
    %cst_22 = arith.constant dense<0.000000e+00> : vector<256xf32>
    %63 = vector.multi_reduction <add>, %62, %cst_22 [0] : vector<32x256xf32> to vector<256xf32>
    %64 = vector.shape_cast %63 : vector<256xf32> to vector<1x256xf32>
    %65 = arith.subf %11, %53 : vector<32x256xf32>
    %cst_23 = arith.constant 9.99999997E-7 : f32
    %66 = vector.broadcast %cst_23 : f32 to vector<32x256xf32>
    %67 = arith.addf %65, %66 : vector<32x256xf32>
    %68 = arith.mulf %67, %67 : vector<32x256xf32>
    %cst_24 = arith.constant dense<0.000000e+00> : vector<256xf32>
    %69 = vector.multi_reduction <add>, %68, %cst_24 [0] : vector<32x256xf32> to vector<256xf32>
    %70 = vector.shape_cast %69 : vector<256xf32> to vector<1x256xf32>
    %71 = math.sqrt %70 : vector<1x256xf32>
    %72 = arith.subf %11, %54 : vector<32x256xf32>
    %cst_25 = arith.constant 9.99999997E-7 : f32
    %73 = vector.broadcast %cst_25 : f32 to vector<32x256xf32>
    %74 = arith.addf %72, %73 : vector<32x256xf32>
    %75 = arith.mulf %74, %74 : vector<32x256xf32>
    %cst_26 = arith.constant dense<0.000000e+00> : vector<256xf32>
    %76 = vector.multi_reduction <add>, %75, %cst_26 [0] : vector<32x256xf32> to vector<256xf32>
    %77 = vector.shape_cast %76 : vector<256xf32> to vector<1x256xf32>
    %78 = math.sqrt %77 : vector<1x256xf32>
    %79 = arith.subf %71, %78 : vector<1x256xf32>
    %cst_27 = arith.constant 1.000000e+00 : f32
    %80 = vector.broadcast %cst_27 : f32 to vector<1x256xf32>
    %81 = arith.addf %79, %80 : vector<1x256xf32>
    %cst_28 = arith.constant 0.000000e+00 : f32
    %82 = vector.broadcast %cst_28 : f32 to vector<1x256xf32>
    %83 = arith.maximumf %81, %82 : vector<1x256xf32>
    %84 = tpu.concatenate %64, %83 in 0 : vector<1x256xf32>, vector<1x256xf32> -> vector<2x256xf32>
    %c0_29 = arith.constant 0 : index
    %c0_30 = arith.constant 0 : index
    %c0_31 = arith.constant 0 : index
    %85 = vector.load %arg6[%c0_29, %c0_30, %c0_31] : memref<1x2x256xf32, #tpu.memory_space<vmem>>, vector<1x2x256xf32>
    %86 = vector.shape_cast %85 : vector<1x2x256xf32> to vector<2x256xf32>
    %87 = vector.shape_cast %84 : vector<2x256xf32> to vector<1x2x256xf32>
    tpu.vector_store %arg6[%c0_29, %c0_30, %c0_31], %87 {strides = array<i32>} : memref<1x2x256xf32, #tpu.memory_space<vmem>>, vector<1x2x256xf32>,
    return
  }
  func.func @transform_0(%arg0: i32, %arg1: i32) -> (i32, i32, i32) {
    %c0_i32 = arith.constant 0 : i32
    %c0_i32_0 = arith.constant 0 : i32
    return %arg0, %c0_i32, %arg1 : i32, i32, i32
  }
  func.func @transform_1(%arg0: i32, %arg1: i32) -> (i32, i32) {
    %c0_i32 = arith.constant 0 : i32
    %c0_i32_0 = arith.constant 0 : i32
    %c0_i32_1 = arith.constant 0 : i32
    return %c0_i32, %c0_i32_0 : i32, i32
  }
  func.func @transform_2(%arg0: i32, %arg1: i32) -> (i32, i32) {
    %c0_i32 = arith.constant 0 : i32
    %c0_i32_0 = arith.constant 0 : i32
    %c0_i32_1 = arith.constant 0 : i32
    return %c0_i32, %c0_i32_0 : i32, i32
  }
  func.func @transform_3(%arg0: i32, %arg1: i32) -> (i32, i32, i32) {
    %c0_i32 = arith.constant 0 : i32
    %c0_i32_0 = arith.constant 0 : i32
    return %arg0, %c0_i32, %arg1 : i32, i32, i32
  }
  func.func @transform_4(%arg0: i32, %arg1: i32) -> (i32, i32, i32) {
    %c0_i32 = arith.constant 0 : i32
    %c0_i32_0 = arith.constant 0 : i32
    return %arg0, %c0_i32, %arg1 : i32, i32, i32
  }
}

</mosaic_0001>

<llo_original>
// kernel: mem_module_forward.1
$region0: #{mem_module_forward.1}
  #allocation0 [shape = 'u32[]', space=smem, size = 0x4, offset = 0x4, fixed_abs, tag = 'smem constant byte address 0x4 - core index']
  #allocation1 [shape = 'u32[144,128]{1,0:T(1,128)}', space=vmem, size = 0x12000, scoped, tag = 'internal scratch']
  %s0 = inlined_call_operand.vmem [shape: f32[2,32,256], index: 0, kind: input, shape index: {}]
  %s1 = inlined_call_operand.vmem [shape: f32[32,32], index: 1, kind: input, shape index: {}]
  %s2 = inlined_call_operand.vmem [shape: f32[32,32], index: 2, kind: input, shape index: {}]
  %s3 = inlined_call_operand.vmem [shape: f32[2,64,256], index: 3, kind: output, shape index: {0}]
  %s4 = inlined_call_operand.vmem [shape: f32[2,2,256], index: 4, kind: output, shape index: {1}]
  %5 = xla_tuple %s3, %s4
  %s6 = sld [smem:[#allocation0]]
  $region53: #{mem_module_forward.1} parent=0
    _
  %s8 = ssub.s32 1, %s6
  %s9 = scalar_select 0, %s8, %s6
  loop: start=0, step=1, limit=4
  $region2: #{mem_module_forward.1} parent=0 // loop_pre_header
    _
  $region3: #{mem_module_forward.1} parent=0 // loop_header
    %s11 = sphi 0, %s15
    %p12 = scmp.ge.s32.totalorder %s11, 4
    %s18 = sphi 0, %s30
    %s19 = sphi 0, %s26
    %s20 = sphi 0, %s18
    %s21 = sphi 0, %s19
    %s22 = sphi 0, %s20
    %s23 = sphi 0, %s21
    %s35 = sphi 0, %s37
    %s38 = sphi 0, %s35
    %s39 = sphi 0, %s38
    %s55 = sphi 0, %s39
    %s59 = sphi 0, %s59
    %s61 = sphi 0, %s59
    %s62 = sphi 0, %s61
    %s76 = sphi 0, %s62
    %s80 = sphi 0, %s80
    %s82 = sphi 0, %s80
    %s83 = sphi 0, %s82
    %s97 = sphi 0, %s83
    %s105 = sphi 0, %s107
    %s108 = sphi 0, %s105
    %s109 = sphi 0, %s108
    %s125 = sphi 0, %s109
    %s133 = sphi 0, %s135
    %s136 = sphi 0, %s133
    %s137 = sphi 0, %s136
    %s153 = sphi 0, %s137
  $region4: #{mem_module_forward.1} parent=0 // loop_header_branch
    %14 = sbr.rel (%p12) target = $region8
  $region5: #{mem_module_forward.1} parent=0 // loop_body
    %s16 = ssub.s32 %s11, 1
    %s17 = ssub.s32 %s11, 2
    %s24 = sadd.s32 1, %s19
    %p25 = scmp.ge.s32.totalorder %s24, 1
    %s26 = scalar_select %p25, 0, %s24
    %s27 = sadd.s32 1, %s18
    %s28 = scalar_select %p25, %s27, %s18
    %p29 = scmp.ge.s32.totalorder %s28, 2
    %s30 = scalar_select %p29, 0, %s28
    %s31 = ssub.s32 %s18, %s30
    %s32 = ssub.s32 %s19, %s26
    %s33 = sor.u32 %s31, %s32
    %p34 = scmp.eq.s32.totalorder %s33, 0
    %s36 = sadd.s32 %s35, 1
    %s37 = scalar_select %p34, %s35, %s36
    %p40 = pneg %p34
    %p41 = scmp.eq.s32.totalorder %s11, 1
    %p42 = por %p40, %p41
    %p43 = scmp.ne.s32.totalorder %s35, %s38
    %p44 = scmp.eq.s32.totalorder %s11, 0
    %p45 = por %p43, %p44
    %p46 = scmp.ne.s32.totalorder %s35, %s38
    %p47 = scmp.eq.s32.totalorder %s16, 1
    %p48 = por %p46, %p47
    %p49 = scmp.ne.s32.totalorder %s38, %s39
    %p50 = scmp.eq.s32.totalorder %s16, 0
    %p51 = por %p49, %p50
    %p52 = scmp.ne.s32.totalorder %s38, %s39
    %p53 = scmp.eq.s32.totalorder %s17, 1
    %p54 = por %p52, %p53
    %p56 = scmp.ne.s32.totalorder %s39, %s55
    %p57 = scmp.eq.s32.totalorder %s17, 0
    %p58 = por %p56, %p57
    %s60 = sadd.s32 %s59, 1
    %p63 = scmp.eq.s32.totalorder %s11, 1
    %p64 = scmp.ne.s32.totalorder %s59, %s61
    %p65 = scmp.eq.s32.totalorder %s11, 0
    %p66 = por %p64, %p65
    %p67 = scmp.ne.s32.totalorder %s59, %s61
    %p68 = scmp.eq.s32.totalorder %s16, 1
    %p69 = por %p67, %p68
    %p70 = scmp.ne.s32.totalorder %s61, %s62
    %p71 = scmp.eq.s32.totalorder %s16, 0
    %p72 = por %p70, %p71
    %p73 = scmp.ne.s32.totalorder %s61, %s62
    %p74 = scmp.eq.s32.totalorder %s17, 1
    %p75 = por %p73, %p74
    %p77 = scmp.ne.s32.totalorder %s62, %s76
    %p78 = scmp.eq.s32.totalorder %s17, 0
    %p79 = por %p77, %p78
    %s81 = sadd.s32 %s80, 1
    %p84 = scmp.eq.s32.totalorder %s11, 1
    %p85 = scmp.ne.s32.totalorder %s80, %s82
    %p86 = scmp.eq.s32.totalorder %s11, 0
    %p87 = por %p85, %p86
    %p88 = scmp.ne.s32.totalorder %s80, %s82
    %p89 = scmp.eq.s32.totalorder %s16, 1
    %p90 = por %p88, %p89
    %p91 = scmp.ne.s32.totalorder %s82, %s83
    %p92 = scmp.eq.s32.totalorder %s16, 0
    %p93 = por %p91, %p92
    %p94 = scmp.ne.s32.totalorder %s82, %s83
    %p95 = scmp.eq.s32.totalorder %s17, 1
    %p96 = por %p94, %p95
    %p98 = scmp.ne.s32.totalorder %s83, %s97
    %p99 = scmp.eq.s32.totalorder %s17, 0
    %p100 = por %p98, %p99
    %s101 = ssub.s32 %s18, %s30
    %s102 = ssub.s32 %s19, %s26
    %s103 = sor.u32 %s101, %s102
    %p104 = scmp.eq.s32.totalorder %s103, 0
    %s106 = sadd.s32 %s105, 1
    %s107 = scalar_select %p104, %s105, %s106
    %p110 = pneg %p104
    %p111 = scmp.eq.s32.totalorder %s11, 1
    %p112 = por %p110, %p111
    %p113 = scmp.ne.s32.totalorder %s105, %s108
    %p114 = scmp.eq.s32.totalorder %s11, 0
    %p115 = por %p113, %p114
    %p116 = scmp.ne.s32.totalorder %s105, %s108
    %p117 = scmp.eq.s32.totalorder %s16, 1
    %p118 = por %p116, %p117
    %p119 = scmp.ne.s32.totalorder %s108, %s109
    %p120 = scmp.eq.s32.totalorder %s16, 0
    %p121 = por %p119, %p120
    %p122 = scmp.ne.s32.totalorder %s108, %s109
    %p123 = scmp.eq.s32.totalorder %s17, 1
    %p124 = por %p122, %p123
    %p126 = scmp.ne.s32.totalorder %s109, %s125
    %p127 = scmp.eq.s32.totalorder %s17, 0
    %p128 = por %p126, %p127
    %s129 = ssub.s32 %s18, %s30
    %s130 = ssub.s32 %s19, %s26
    %s131 = sor.u32 %s129, %s130
    %p132 = scmp.eq.s32.totalorder %s131, 0
    %s134 = sadd.s32 %s133, 1
    %s135 = scalar_select %p132, %s133, %s134
    %p138 = pneg %p132
    %p139 = scmp.eq.s32.totalorder %s11, 1
    %p140 = por %p138, %p139
    %p141 = scmp.ne.s32.totalorder %s133, %s136
    %p142 = scmp.eq.s32.totalorder %s11, 0
    %p143 = por %p141, %p142
    %p144 = scmp.ne.s32.totalorder %s133, %s136
    %p145 = scmp.eq.s32.totalorder %s16, 1
    %p146 = por %p144, %p145
    %p147 = scmp.ne.s32.totalorder %s136, %s137
    %p148 = scmp.eq.s32.totalorder %s16, 0
    %p149 = por %p147, %p148
    %p150 = scmp.ne.s32.totalorder %s136, %s137
    %p151 = scmp.eq.s32.totalorder %s17, 1
    %p152 = por %p150, %p151
    %p154 = scmp.ne.s32.totalorder %s137, %s153
    %p155 = scmp.eq.s32.totalorder %s17, 0
    %p156 = por %p154, %p155
    %p157 = scmp.le.s32.totalorder 1, %s11
    %p158 = scmp.lt.s32.totalorder %s11, 3
    %p159 = pnand %p157, %p158
    %p160 = pneg %p159
    // Predicated region
    $region9: #{mem_module_forward.1} parent=5 // pred_check
      _
    $region10: #{mem_module_forward.1} parent=5 // pred_check_branch
      %162 = sbr.rel (%p159) target = $region12
    $region11: #{mem_module_forward.1} parent=5 // pred_region
      %s163 = ssub.s32 %s11, 1
      // Predicated region
      $region13: #{mem_module_forward.1} parent=11 // pred_check
        %p164 = pneg %p72
      $region14: #{mem_module_forward.1} parent=11 // pred_check_branch
        %166 = sbr.rel (%p164) target = $region16
      $region15: #{mem_module_forward.1} parent=11 // pred_region
        _
      $region16: #{mem_module_forward.1} parent=11 // pred_fallthru
        _
      // Predicated region
      $region17: #{mem_module_forward.1} parent=11 // pred_check
        %p167 = pneg %p93
      $region18: #{mem_module_forward.1} parent=11 // pred_check_branch
        %169 = sbr.rel (%p167) target = $region20
      $region19: #{mem_module_forward.1} parent=11 // pred_region
        _
      $region20: #{mem_module_forward.1} parent=11 // pred_fallthru
        _
    $region12: #{mem_module_forward.1} parent=5 // pred_fallthru
      _
    %p170 = scmp.lt.s32.totalorder %s11, 2
    // Predicated region
    $region21: #{mem_module_forward.1} parent=5 // pred_check
      %p171 = pneg %p170
    $region22: #{mem_module_forward.1} parent=5 // pred_check_branch
      %173 = sbr.rel (%p171) target = $region24
    $region23: #{mem_module_forward.1} parent=5 // pred_region
      // Predicated region
      $region25: #{mem_module_forward.1} parent=23 // pred_check
        %p174 = pneg %p45
      $region26: #{mem_module_forward.1} parent=23 // pred_check_branch
        %176 = sbr.rel (%p174) target = $region28
      $region27: #{mem_module_forward.1} parent=23 // pred_region
        %s177 = smul.u32 2, %s19
        %p178 = scmp.lt.s32.totalorder %s18, 1
        %s179 = scalar_select %p178, %s18, 1
        %p180 = scmp.lt.s32.totalorder %s177, 1
        %s181 = scalar_select %p180, %s177, 1
        %s182 = smul.addr %s179, 8
        %s183 = sadd.s32 %s181, %s182
        %s184 = smul.addr %s183, 8
        %s185 = scalar_lea.vmem %s0, %s184
        %s186 = smul.u32 2, %s19
      $region28: #{mem_module_forward.1} parent=23 // pred_fallthru
        _
    $region24: #{mem_module_forward.1} parent=5 // pred_fallthru
      _
    %p187 = scmp.le.s32.totalorder 1, %s11
    %p188 = scmp.lt.s32.totalorder %s11, 3
    %p189 = pnand %p187, %p188
    %p190 = pneg %p189
    // Predicated region
    $region29: #{mem_module_forward.1} parent=5 // pred_check
      _
    $region30: #{mem_module_forward.1} parent=5 // pred_check_branch
      %192 = sbr.rel (%p189) target = $region32
    $region31: #{mem_module_forward.1} parent=5 // pred_region
      %s193 = ssub.s32 %s11, 1
      %s194 = smul.u32 2, %s21
      %p195 = scmp.lt.s32.totalorder %s20, 1
      %s196 = scalar_select %p195, %s20, 1
      %p197 = scmp.lt.s32.totalorder %s194, 1
      %s198 = scalar_select %p197, %s194, 1
      %s199 = smul.addr %s196, 8
      %s200 = sadd.s32 %s198, %s199
      %s201 = smul.addr %s200, 8
      %s202 = scalar_lea.vmem %s0, %s201
      %p203 = pneg %p51
      %p204 = pneg %p48
      %p205 = pneg %p72
      %p206 = pneg %p69
      %p207 = pneg %p93
      %p208 = pneg %p90
      %p209 = pneg %p121
      %p210 = pneg %p118
      %s211 = smul.u32 2, %s21
      %p212 = scmp.lt.s32.totalorder %s20, 1
      %s213 = scalar_select %p212, %s20, 1
      %p214 = scmp.lt.s32.totalorder %s211, 1
      %s215 = scalar_select %p214, %s211, 1
      %s216 = smul.addr %s213, 16
      %s217 = sadd.s32 %s215, %s216
      %s218 = smul.addr %s217, 8
      %s219 = scalar_lea.vmem %s3, %s218
      %p220 = pneg %p149
      %p221 = pneg %p146
      %s222 = smul.u32 2, %s21
      %p223 = scmp.lt.s32.totalorder %s20, 1
      %s224 = scalar_select %p223, %s20, 1
      %p225 = scmp.lt.s32.totalorder %s222, 1
      %s226 = scalar_select %p225, %s222, 1
      %s227 = smul.addr %s224, 2
      %s228 = sadd.s32 %s226, %s227
      %s229 = smul.addr %s228, 2
      %s230 = scalar_lea.vmem %s4, %s229
      %s231 = smul.u32 2, %s21
      %p232 = scmp.lt.s32.totalorder %s20, 1
      %s233 = scalar_select %p232, %s20, 1
      %p234 = scmp.lt.s32.totalorder %s231, 1
      %s235 = scalar_select %p234, %s231, 1
      %s236 = smul.addr %s233, 8
      %s237 = sadd.s32 %s235, %s236
      %s238 = smul.addr %s237, 8
      %s239 = scalar_lea.vmem %s0, %s238
      %s240 = smul.u32 2, %s21
      %s241 = smul.u32 2, %s21
      %p242 = scmp.lt.s32.totalorder %s20, 1
      %s243 = scalar_select %p242, %s20, 1
      %p244 = scmp.lt.s32.totalorder %s241, 1
      %s245 = scalar_select %p244, %s241, 1
      %s246 = smul.addr %s243, 16
      %s247 = sadd.s32 %s245, %s246
      %s248 = smul.addr %s247, 8
      %s249 = scalar_lea.vmem %s3, %s248
      %s250 = smul.u32 2, %s21
      %s251 = smul.u32 2, %s21
      %p252 = scmp.lt.s32.totalorder %s20, 1
      %s253 = scalar_select %p252, %s20, 1
      %p254 = scmp.lt.s32.totalorder %s251, 1
      %s255 = scalar_select %p254, %s251, 1
      %s256 = smul.addr %s253, 2
      %s257 = sadd.s32 %s255, %s256
      %s258 = smul.addr %s257, 2
      %s259 = scalar_lea.vmem %s4, %s258
      %s260 = smul.u32 2, %s21
      %v261 = vld [vmem:[%s239] sm:$0xff]
      %v262 = vld [vmem:[%s239 + $0x8] sm:$0xff]
      %v263 = vld [vmem:[%s239 + $0x10] sm:$0xff]
      %v264 = vld [vmem:[%s239 + $0x18] sm:$0xff]
      %v265 = vld [vmem:[%s239 + $0x20] sm:$0xff]
      %v266 = vld [vmem:[%s239 + $0x28] sm:$0xff]
      %v267 = vld [vmem:[%s239 + $0x30] sm:$0xff]
      %v268 = vld [vmem:[%s239 + $0x38] sm:$0xff]
      %v269 = vld [vmem:[%s1] sm:$0xff]
      %v270 = vld [vmem:[%s1 + $0x8] sm:$0xff]
      %v271 = vld [vmem:[%s1 + $0x10] sm:$0xff]
      %v272 = vld [vmem:[%s1 + $0x18] sm:$0xff]
      %v273 = vld [vmem:[%s2] sm:$0xff]
      %v274 = vld [vmem:[%s2 + $0x8] sm:$0xff]
      %v275 = vld [vmem:[%s2 + $0x10] sm:$0xff]
      %v276 = vld [vmem:[%s2 + $0x18] sm:$0xff]
      %v277 = vand.u32 2147483647, %v261
      %v278 = vand.u32 2147483647, %v262
      %v279 = vand.u32 2147483647, %v263
      %v280 = vand.u32 2147483647, %v264
      %v281 = vand.u32 2147483647, %v265
      %v282 = vand.u32 2147483647, %v266
      %v283 = vand.u32 2147483647, %v267
      %v284 = vand.u32 2147483647, %v268
      %v285 = vadd.f32 %v277, %v279
      %v286 = vadd.f32 %v285, %v281
      %v287 = vadd.f32 %v286, %v283
      %v288 = vrot.slane %v287, 4
      %v289 = vadd.f32 %v287, %v288
      %v290 = vrot.slane %v289, 2
      %v291 = vadd.f32 %v289, %v290
      %v292 = vrot.slane %v291, 1
      %v293 = vadd.f32 %v291, %v292
      %v294 = vadd.f32 %v278, %v280
      %v295 = vadd.f32 %v294, %v282
      %v296 = vadd.f32 %v295, %v284
      %v297 = vrot.slane %v296, 4
      %v298 = vadd.f32 %v296, %v297
      %v299 = vrot.slane %v298, 2
      %v300 = vadd.f32 %v298, %v299
      %v301 = vrot.slane %v300, 1
      %v302 = vadd.f32 %v300, %v301
      %v303 = vmax.f32 %v293, 1e-12
      %v304 = vmax.f32 %v302, 1e-12
      %v305 = vrcp.pop %v303
      %v306 = vrcp.pop %v304
      %v307 = vmul.f32 %v261, %v305
      %v308 = vmul.f32 %v262, %v306
      %v309 = vmul.f32 %v263, %v305
      %v310 = vmul.f32 %v264, %v306
      %v311 = vmul.f32 %v265, %v305
      %v312 = vmul.f32 %v266, %v306
      %v313 = vmul.f32 %v267, %v305
      %v314 = vmul.f32 %v268, %v306
      %vm315 = vcmask 261120
      %v317 = vsel %vm315, %v269, 0
      %v320 = vsel %vm315, %v270, 0
      %v323 = vsel %vm315, %v271, 0
      %v326 = vsel %vm315, %v272, 0
      %328 = vmatprep.subr.mxu0 %v308
      %329 = vmatpush1.msra.mxu0 %v307
      %330 = vmatprep.subr.mxu0 %v310
      %331 = vmatpush1.msra.mxu0 %v309
      %332 = vmatprep.subr.mxu0 %v312
      %333 = vmatpush1.msra.mxu0 %v311
      %334 = vmatprep.subr.mxu0 %v314
      %335 = vmatpush1.msra.mxu0 %v313
      %336 = vmatprep.subr.mxu0 0.0
      %337 = vmatpush1.msra.mxu0 0.0
      %338 = vmatprep.subr.mxu0 0.0
      %339 = vmatpush1.msra.mxu0 0.0
      %340 = vmatprep.subr.mxu0 0.0
      %341 = vmatpush1.msra.mxu0 0.0
      %342 = vmatprep.subr.mxu0 0.0
      %343 = vmatpush1.msra.mxu0 0.0
      %344 = vmatprep.subr.mxu0 0.0
      %345 = vmatpush1.msra.mxu0 0.0
      %346 = vmatprep.subr.mxu0 0.0
      %347 = vmatpush1.msra.mxu0 0.0
      %348 = vmatprep.subr.mxu0 0.0
      %349 = vmatpush1.msra.mxu0 0.0
      %350 = vmatprep.subr.mxu0 0.0
      %351 = vmatpush1.msra.mxu0 0.0
      %352 = vmatprep.subr.mxu0 0.0
      %353 = vmatpush1.msra.mxu0 0.0
      %354 = vmatprep.subr.mxu0 0.0
      %355 = vmatpush1.msra.mxu0 0.0
      %356 = vmatprep.subr.mxu0 0.0
      %357 = vmatpush1.msra.mxu0 0.0
      %358 = vmatprep.subr.mxu0 0.0
      %359 = vmatpush1.msra.mxu0 0.0
      %360 = vmatprep.subr.mxu0 0.0
      %361 = vmatpush1.msra.mxu0 0.0
      %362 = vmatprep.subr.mxu0 0.0
      %363 = vmatpush1.msra.mxu0 0.0
      %364 = vmatprep.subr.mxu0 0.0
      %365 = vmatpush1.msra.mxu0 0.0
      %366 = vmatprep.subr.mxu0 0.0
      %367 = vmatpush1.msra.mxu0 0.0
      %368 = vmatprep.subr.mxu0 0.0
      %369 = vmatpush1.msra.mxu0 0.0
      %370 = vmatprep.subr.mxu0 0.0
      %371 = vmatpush1.msra.mxu0 0.0
      %372 = vmatprep.subr.mxu0 0.0
      %373 = vmatpush1.msra.mxu0 0.0
      %374 = vmatprep.subr.mxu0 0.0
      %375 = vmatpush1.msra.mxu0 0.0
      %376 = vmatprep.subr.mxu0 0.0
      %377 = vmatpush1.msra.mxu0 0.0
      %378 = vmatprep.subr.mxu0 0.0
      %379 = vmatpush1.msra.mxu0 0.0
      %380 = vmatprep.subr.mxu0 0.0
      %381 = vmatpush1.msra.mxu0 0.0
      %382 = vmatprep.subr.mxu0 0.0
      %383 = vmatpush1.msra.mxu0 0.0
      %384 = vmatprep.subr.mxu0 0.0
      %385 = vmatpush1.msra.mxu0 0.0
      %386 = vmatprep.subr.mxu0 0.0
      %387 = vmatpush1.msra.mxu0 0.0
      %388 = vmatprep.subr.mxu0 0.0
      %389 = vmatpush1.msra.mxu0 0.0
      %390 = vmatprep.subr.mxu0 0.0
      %391 = vmatpush1.msra.mxu0 0.0
      %392 = vmatprep.mubr.f32.mxu0 0.0
      %393 = vmatmul.mubr.f32.gmra.mrb[0].mxu0 %v317
      %v394 = vpop.f32.mrb[0].mxu0
      %v395 = vadd.f32 0.0, %v394
      %v396 = vpop.f32.mrb[0].mxu0
      %v397 = vadd.f32 0.0, %v396
      %398 = vmatprep.mubr.f32.mxu0 0.0
      %399 = vmatmul.mubr.f32.gmra.mrb[0].mxu0 %v320
      %v400 = vpop.f32.mrb[0].mxu0
      %v401 = vadd.f32 0.0, %v400
      %v402 = vpop.f32.mrb[0].mxu0
      %v403 = vadd.f32 0.0, %v402
      %404 = vmatprep.mubr.f32.mxu0 0.0
      %405 = vmatmul.mubr.f32.gmra.mrb[0].mxu0 %v323
      %v406 = vpop.f32.mrb[0].mxu0
      %v407 = vadd.f32 0.0, %v406
      %v408 = vpop.f32.mrb[0].mxu0
      %v409 = vadd.f32 0.0, %v408
      %410 = vmatprep.mubr.f32.mxu0 0.0
      %411 = vmatmul.mubr.f32.gmra.mrb[0].mxu0 %v326
      %v412 = vpop.f32.mrb[0].mxu0
      %v413 = vadd.f32 0.0, %v412
      %v414 = vpop.f32.mrb[0].mxu0
      %v415 = vadd.f32 0.0, %v414
      %416 = vdwg.mxu0
      %v417 = vmax.f32 %v395, %v407
      %v418 = vmax.f32 %v401, %v413
      %v419 = vmax.f32 %v417, %v418
      %v420 = vrot.slane %v419, 4
      %v421 = vmax.f32 %v419, %v420
      %v422 = vrot.slane %v421, 2
      %v423 = vmax.f32 %v421, %v422
      %v424 = vrot.slane %v423, 1
      %v425 = vmax.f32 %v423, %v424
      %v426 = vmax.f32 %v397, %v409
      %v427 = vmax.f32 %v403, %v415
      %v428 = vmax.f32 %v426, %v427
      %v429 = vrot.slane %v428, 4
      %v430 = vmax.f32 %v428, %v429
      %v431 = vrot.slane %v430, 2
      %v432 = vmax.f32 %v430, %v431
      %v433 = vrot.slane %v432, 1
      %v434 = vmax.f32 %v432, %v433
      %v435 = vsub.f32 %v395, %v425
      %v436 = vsub.f32 %v397, %v434
      %v437 = vsub.f32 %v401, %v425
      %v438 = vsub.f32 %v403, %v434
      %v439 = vsub.f32 %v407, %v425
      %v440 = vsub.f32 %v409, %v434
      %v441 = vsub.f32 %v413, %v425
      %v442 = vsub.f32 %v415, %v434
      %v443 = vmul.f32 %v435, 1.442695
      %v444 = vpow.pop %v443
      %v445 = vmul.f32 %v436, 1.442695
      %v446 = vpow.pop %v445
      %v447 = vmul.f32 %v437, 1.442695
      %v448 = vpow.pop %v447
      %v449 = vmul.f32 %v438, 1.442695
      %v450 = vpow.pop %v449
      %v451 = vmul.f32 %v439, 1.442695
      %v452 = vpow.pop %v451
      %v453 = vmul.f32 %v440, 1.442695
      %v454 = vpow.pop %v453
      %v455 = vmul.f32 %v441, 1.442695
      %v456 = vpow.pop %v455
      %v457 = vmul.f32 %v442, 1.442695
      %v458 = vpow.pop %v457
      %v459 = vadd.f32 %v444, %v448
      %v460 = vadd.f32 %v459, %v452
      %v461 = vadd.f32 %v460, %v456
      %v462 = vrot.slane %v461, 4
      %v463 = vadd.f32 %v461, %v462
      %v464 = vrot.slane %v463, 2
      %v465 = vadd.f32 %v463, %v464
      %v466 = vrot.slane %v465, 1
      %v467 = vadd.f32 %v465, %v466
      %v468 = vadd.f32 %v446, %v450
      %v469 = vadd.f32 %v468, %v454
      %v470 = vadd.f32 %v469, %v458
      %v471 = vrot.slane %v470, 4
      %v472 = vadd.f32 %v470, %v471
      %v473 = vrot.slane %v472, 2
      %v474 = vadd.f32 %v472, %v473
      %v475 = vrot.slane %v474, 1
      %v476 = vadd.f32 %v474, %v475
      %v477 = vrcp.pop %v467
      %v478 = vrcp.pop %v476
      %v479 = vmul.f32 %v444, %v477
      %v480 = vmul.f32 %v446, %v478
      %v481 = vmul.f32 %v448, %v477
      %v482 = vmul.f32 %v450, %v478
      %v483 = vmul.f32 %v452, %v477
      %v484 = vmul.f32 %v454, %v478
      %v485 = vmul.f32 %v456, %v477
      %v486 = vmul.f32 %v458, %v478
      %v487 = vlaneseq
      %v488 = vshrl.u32 %v487, 7
      %v489 = vadd.s32 %v488, 8
      %v490 = vadd.s32 %v488, 16
      %v491 = vadd.s32 %v488, 24
      %v492 = vmax.f32 %v479, %v483
      %v493 = vmax.f32 %v481, %v485
      %v494 = vmax.f32 %v492, %v493
      %v495 = vrot.slane %v494, 4
      %v496 = vmax.f32 %v494, %v495
      %v497 = vrot.slane %v496, 2
      %v498 = vmax.f32 %v496, %v497
      %v499 = vrot.slane %v498, 1
      %v500 = vmax.f32 %v498, %v499
      %v501 = vmax.f32 %v480, %v484
      %v502 = vmax.f32 %v482, %v486
      %v503 = vmax.f32 %v501, %v502
      %v504 = vrot.slane %v503, 4
      %v505 = vmax.f32 %v503, %v504
      %v506 = vrot.slane %v505, 2
      %v507 = vmax.f32 %v505, %v506
      %v508 = vrot.slane %v507, 1
      %v509 = vmax.f32 %v507, %v508
      %vm510 = vcmp.eq.f32.partialorder %v479, %v500
      %vm511 = vcmp.eq.f32.partialorder %v480, %v509
      %vm512 = vcmp.eq.f32.partialorder %v481, %v500
      %vm513 = vcmp.eq.f32.partialorder %v482, %v509
      %vm514 = vcmp.eq.f32.partialorder %v483, %v500
      %vm515 = vcmp.eq.f32.partialorder %v484, %v509
      %vm516 = vcmp.eq.f32.partialorder %v485, %v500
      %vm517 = vcmp.eq.f32.partialorder %v486, %v509
      %v518 = vsel %vm510, %v488, 32
      %v519 = vsel %vm511, %v488, 32
      %v520 = vsel %vm512, %v489, 32
      %v521 = vsel %vm513, %v489, 32
      %v522 = vsel %vm514, %v490, 32
      %v523 = vsel %vm515, %v490, 32
      %v524 = vsel %vm516, %v491, 32
      %v525 = vsel %vm517, %v491, 32
      %vm526 = vcmp.lt.s32.totalorder %v518, %v522
      %v527 = vsel %vm526, %v518, %v522
      %vm528 = vcmp.lt.s32.totalorder %v520, %v524
      %v529 = vsel %vm528, %v520, %v524
      %vm530 = vcmp.lt.s32.totalorder %v527, %v529
      %v531 = vsel %vm530, %v527, %v529
      %v532 = vrot.slane %v531, 4
      %vm533 = vcmp.lt.s32.totalorder %v531, %v532
      %v534 = vsel %vm533, %v531, %v532
      %v535 = vrot.slane %v534, 2
      %vm536 = vcmp.lt.s32.totalorder %v534, %v535
      %v537 = vsel %vm536, %v534, %v535
      %v538 = vrot.slane %v537, 1
      %vm539 = vcmp.lt.s32.totalorder %v537, %v538
      %v540 = vsel %vm539, %v537, %v538
      %vm541 = vcmp.lt.s32.totalorder %v519, %v523
      %v542 = vsel %vm541, %v519, %v523
      %vm543 = vcmp.lt.s32.totalorder %v521, %v525
      %v544 = vsel %vm543, %v521, %v525
      %vm545 = vcmp.lt.s32.totalorder %v542, %v544
      %v546 = vsel %vm545, %v542, %v544
      %v547 = vrot.slane %v546, 4
      %vm548 = vcmp.lt.s32.totalorder %v546, %v547
      %v549 = vsel %vm548, %v546, %v547
      %v550 = vrot.slane %v549, 2
      %vm551 = vcmp.lt.s32.totalorder %v549, %v550
      %v552 = vsel %vm551, %v549, %v550
      %v553 = vrot.slane %v552, 1
      %vm554 = vcmp.lt.s32.totalorder %v552, %v553
      %v555 = vsel %vm554, %v552, %v553
      %vm556 = vcmp.eq.s32.totalorder %v488, %v540
      %vm557 = vcmp.eq.s32.totalorder %v488, %v555
      %vm558 = vcmp.eq.s32.totalorder %v489, %v540
      %vm559 = vcmp.eq.s32.totalorder %v489, %v555
      %vm560 = vcmp.eq.s32.totalorder %v490, %v540
      %vm561 = vcmp.eq.s32.totalorder %v490, %v555
      %vm562 = vcmp.eq.s32.totalorder %v491, %v540
      %vm563 = vcmp.eq.s32.totalorder %v491, %v555
      %v564 = vsel %vm556, -inf, %v479
      %v565 = vsel %vm557, -inf, %v480
      %v566 = vsel %vm558, -inf, %v481
      %v567 = vsel %vm559, -inf, %v482
      %v568 = vsel %vm560, -inf, %v483
      %v569 = vsel %vm561, -inf, %v484
      %v570 = vsel %vm562, -inf, %v485
      %v571 = vsel %vm563, -inf, %v486
      %v572 = vmax.f32 %v564, %v568
      %v573 = vmax.f32 %v566, %v570
      %v574 = vmax.f32 %v572, %v573
      %v575 = vrot.slane %v574, 4
      %v576 = vmax.f32 %v574, %v575
      %v577 = vrot.slane %v576, 2
      %v578 = vmax.f32 %v576, %v577
      %v579 = vrot.slane %v578, 1
      %v580 = vmax.f32 %v578, %v579
      %v581 = vmax.f32 %v565, %v569
      %v582 = vmax.f32 %v567, %v571
      %v583 = vmax.f32 %v581, %v582
      %v584 = vrot.slane %v583, 4
      %v585 = vmax.f32 %v583, %v584
      %v586 = vrot.slane %v585, 2
      %v587 = vmax.f32 %v585, %v586
      %v588 = vrot.slane %v587, 1
      %v589 = vmax.f32 %v587, %v588
      %vm590 = vcmp.eq.f32.partialorder %v564, %v580
      %vm591 = vcmp.eq.f32.partialorder %v565, %v589
      %vm592 = vcmp.eq.f32.partialorder %v566, %v580
      %vm593 = vcmp.eq.f32.partialorder %v567, %v589
      %vm594 = vcmp.eq.f32.partialorder %v568, %v580
      %vm595 = vcmp.eq.f32.partialorder %v569, %v589
      %vm596 = vcmp.eq.f32.partialorder %v570, %v580
      %vm597 = vcmp.eq.f32.partialorder %v571, %v589
      %v598 = vsel %vm590, %v488, 32
      %v599 = vsel %vm591, %v488, 32
      %v600 = vsel %vm592, %v489, 32
      %v601 = vsel %vm593, %v489, 32
      %v602 = vsel %vm594, %v490, 32
      %v603 = vsel %vm595, %v490, 32
      %v604 = vsel %vm596, %v491, 32
      %v605 = vsel %vm597, %v491, 32
      %vm606 = vcmp.lt.s32.totalorder %v598, %v602
      %v607 = vsel %vm606, %v598, %v602
      %vm608 = vcmp.lt.s32.totalorder %v600, %v604
      %v609 = vsel %vm608, %v600, %v604
      %vm610 = vcmp.lt.s32.totalorder %v607, %v609
      %v611 = vsel %vm610, %v607, %v609
      %v612 = vrot.slane %v611, 4
      %vm613 = vcmp.lt.s32.totalorder %v611, %v612
      %v614 = vsel %vm613, %v611, %v612
      %v615 = vrot.slane %v614, 2
      %vm616 = vcmp.lt.s32.totalorder %v614, %v615
      %v617 = vsel %vm616, %v614, %v615
      %v618 = vrot.slane %v617, 1
      %vm619 = vcmp.lt.s32.totalorder %v617, %v618
      %v620 = vsel %vm619, %v617, %v618
      %vm621 = vcmp.lt.s32.totalorder %v599, %v603
      %v622 = vsel %vm621, %v599, %v603
      %vm623 = vcmp.lt.s32.totalorder %v601, %v605
      %v624 = vsel %vm623, %v601, %v605
      %vm625 = vcmp.lt.s32.totalorder %v622, %v624
      %v626 = vsel %vm625, %v622, %v624
      %v627 = vrot.slane %v626, 4
      %vm628 = vcmp.lt.s32.totalorder %v626, %v627
      %v629 = vsel %vm628, %v626, %v627
      %v630 = vrot.slane %v629, 2
      %vm631 = vcmp.lt.s32.totalorder %v629, %v630
      %v632 = vsel %vm631, %v629, %v630
      %v633 = vrot.slane %v632, 1
      %vm634 = vcmp.lt.s32.totalorder %v632, %v633
      %v635 = vsel %vm634, %v632, %v633
      %vm636 = vcmp.eq.s32.totalorder %v488, %v620
      %vm637 = vcmp.eq.s32.totalorder %v488, %v635
      %vm638 = vcmp.eq.s32.totalorder %v489, %v620
      %vm639 = vcmp.eq.s32.totalorder %v489, %v635
      %vm640 = vcmp.eq.s32.totalorder %v490, %v620
      %vm641 = vcmp.eq.s32.totalorder %v490, %v635
      %vm642 = vcmp.eq.s32.totalorder %v491, %v620
      %vm643 = vcmp.eq.s32.totalorder %v491, %v635
      %v644 = vsel %vm556, 1, 0
      %v645 = vsel %vm557, 1, 0
      %v646 = vsel %vm558, 1, 0
      %v647 = vsel %vm559, 1, 0
      %v648 = vsel %vm560, 1, 0
      %v649 = vsel %vm561, 1, 0
      %v650 = vsel %vm562, 1, 0
      %v651 = vsel %vm563, 1, 0
      %v652 = vcvt.s32.f32 %v644
      %v653 = vcvt.s32.f32 %v645
      %v654 = vcvt.s32.f32 %v646
      %v655 = vcvt.s32.f32 %v647
      %v656 = vcvt.s32.f32 %v648
      %v657 = vcvt.s32.f32 %v649
      %v658 = vcvt.s32.f32 %v650
      %v659 = vcvt.s32.f32 %v651
      %v660 = vsel %vm636, 1, 0
      %v661 = vsel %vm637, 1, 0
      %v662 = vsel %vm638, 1, 0
      %v663 = vsel %vm639, 1, 0
      %v664 = vsel %vm640, 1, 0
      %v665 = vsel %vm641, 1, 0
      %v666 = vsel %vm642, 1, 0
      %v667 = vsel %vm643, 1, 0
      %v668 = vcvt.s32.f32 %v660
      %v669 = vcvt.s32.f32 %v661
      %v670 = vcvt.s32.f32 %v662
      %v671 = vcvt.s32.f32 %v663
      %v672 = vcvt.s32.f32 %v664
      %v673 = vcvt.s32.f32 %v665
      %v674 = vcvt.s32.f32 %v666
      %v675 = vcvt.s32.f32 %v667
      %v677 = vsel %vm315, %v273, 0
      %v680 = vsel %vm315, %v274, 0
      %v683 = vsel %vm315, %v275, 0
      %v686 = vsel %vm315, %v276, 0
      %688 = vmatprep.subr.mxu0 %v480
      %689 = vmatpush1.msra.mxu0 %v479
      %690 = vmatprep.subr.mxu0 %v482
      %691 = vmatpush1.msra.mxu0 %v481
      %692 = vmatprep.subr.mxu0 %v484
      %693 = vmatpush1.msra.mxu0 %v483
      %694 = vmatprep.subr.mxu0 %v486
      %695 = vmatpush1.msra.mxu0 %v485
      %696 = vmatprep.subr.mxu0 0.0
      %697 = vmatpush1.msra.mxu0 0.0
      %698 = vmatprep.subr.mxu0 0.0
      %699 = vmatpush1.msra.mxu0 0.0
      %700 = vmatprep.subr.mxu0 0.0
      %701 = vmatpush1.msra.mxu0 0.0
      %702 = vmatprep.subr.mxu0 0.0
      %703 = vmatpush1.msra.mxu0 0.0
      %704 = vmatprep.subr.mxu0 0.0
      %705 = vmatpush1.msra.mxu0 0.0
      %706 = vmatprep.subr.mxu0 0.0
      %707 = vmatpush1.msra.mxu0 0.0
      %708 = vmatprep.subr.mxu0 0.0
      %709 = vmatpush1.msra.mxu0 0.0
      %710 = vmatprep.subr.mxu0 0.0
      %711 = vmatpush1.msra.mxu0 0.0
      %712 = vmatprep.subr.mxu0 0.0
      %713 = vmatpush1.msra.mxu0 0.0
      %714 = vmatprep.subr.mxu0 0.0
      %715 = vmatpush1.msra.mxu0 0.0
      %716 = vmatprep.subr.mxu0 0.0
      %717 = vmatpush1.msra.mxu0 0.0
      %718 = vmatprep.subr.mxu0 0.0
      %719 = vmatpush1.msra.mxu0 0.0
      %720 = vmatprep.subr.mxu0 0.0
      %721 = vmatpush1.msra.mxu0 0.0
      %722 = vmatprep.subr.mxu0 0.0
      %723 = vmatpush1.msra.mxu0 0.0
      %724 = vmatprep.subr.mxu0 0.0
      %725 = vmatpush1.msra.mxu0 0.0
      %726 = vmatprep.subr.mxu0 0.0
      %727 = vmatpush1.msra.mxu0 0.0
      %728 = vmatprep.subr.mxu0 0.0
      %729 = vmatpush1.msra.mxu0 0.0
      %730 = vmatprep.subr.mxu0 0.0
      %731 = vmatpush1.msra.mxu0 0.0
      %732 = vmatprep.subr.mxu0 0.0
      %733 = vmatpush1.msra.mxu0 0.0
      %734 = vmatprep.subr.mxu0 0.0
      %735 = vmatpush1.msra.mxu0 0.0
      %736 = vmatprep.subr.mxu0 0.0
      %737 = vmatpush1.msra.mxu0 0.0
      %738 = vmatprep.subr.mxu0 0.0
      %739 = vmatpush1.msra.mxu0 0.0
      %740 = vmatprep.subr.mxu0 0.0
      %741 = vmatpush1.msra.mxu0 0.0
      %742 = vmatprep.subr.mxu0 0.0
      %743 = vmatpush1.msra.mxu0 0.0
      %744 = vmatprep.subr.mxu0 0.0
      %745 = vmatpush1.msra.mxu0 0.0
      %746 = vmatprep.subr.mxu0 0.0
      %747 = vmatpush1.msra.mxu0 0.0
      %748 = vmatprep.subr.mxu0 0.0
      %749 = vmatpush1.msra.mxu0 0.0
      %750 = vmatprep.subr.mxu0 0.0
      %751 = vmatpush1.msra.mxu0 0.0
      %752 = vmatprep.mubr.f32.mxu0 0.0
      %753 = vmatmul.mubr.f32.gmra.mrb[0].mxu0 %v677
      %v754 = vpop.f32.mrb[0].mxu0
      %v755 = vadd.f32 0.0, %v754
      %v756 = vpop.f32.mrb[0].mxu0
      %v757 = vadd.f32 0.0, %v756
      %758 = vmatprep.mubr.f32.mxu0 0.0
      %759 = vmatmul.mubr.f32.gmra.mrb[0].mxu0 %v680
      %v760 = vpop.f32.mrb[0].mxu0
      %v761 = vadd.f32 0.0, %v760
      %v762 = vpop.f32.mrb[0].mxu0
      %v763 = vadd.f32 0.0, %v762
      %764 = vmatprep.mubr.f32.mxu0 0.0
      %765 = vmatmul.mubr.f32.gmra.mrb[0].mxu0 %v683
      %v766 = vpop.f32.mrb[0].mxu0
      %v767 = vadd.f32 0.0, %v766
      %v768 = vpop.f32.mrb[0].mxu0
      %v769 = vadd.f32 0.0, %v768
      %770 = vmatprep.mubr.f32.mxu0 0.0
      %771 = vmatmul.mubr.f32.gmra.mrb[0].mxu0 %v686
      %v772 = vpop.f32.mrb[0].mxu0
      %v773 = vadd.f32 0.0, %v772
      %v774 = vpop.f32.mrb[0].mxu0
      %v775 = vadd.f32 0.0, %v774
      %776 = vdwg.mxu0
      %777 = vmatprep.subr.mxu0 %v653
      %778 = vmatpush1.msra.mxu0 %v652
      %779 = vmatprep.subr.mxu0 %v655
      %780 = vmatpush1.msra.mxu0 %v654
      %781 = vmatprep.subr.mxu0 %v657
      %782 = vmatpush1.msra.mxu0 %v656
      %783 = vmatprep.subr.mxu0 %v659
      %784 = vmatpush1.msra.mxu0 %v658
      %785 = vmatprep.subr.mxu0 0.0
      %786 = vmatpush1.msra.mxu0 0.0
      %787 = vmatprep.subr.mxu0 0.0
      %788 = vmatpush1.msra.mxu0 0.0
      %789 = vmatprep.subr.mxu0 0.0
      %790 = vmatpush1.msra.mxu0 0.0
      %791 = vmatprep.subr.mxu0 0.0
      %792 = vmatpush1.msra.mxu0 0.0
      %793 = vmatprep.subr.mxu0 0.0
      %794 = vmatpush1.msra.mxu0 0.0
      %795 = vmatprep.subr.mxu0 0.0
      %796 = vmatpush1.msra.mxu0 0.0
      %797 = vmatprep.subr.mxu0 0.0
      %798 = vmatpush1.msra.mxu0 0.0
      %799 = vmatprep.subr.mxu0 0.0
      %800 = vmatpush1.msra.mxu0 0.0
      %801 = vmatprep.subr.mxu0 0.0
      %802 = vmatpush1.msra.mxu0 0.0
      %803 = vmatprep.subr.mxu0 0.0
      %804 = vmatpush1.msra.mxu0 0.0
      %805 = vmatprep.subr.mxu0 0.0
      %806 = vmatpush1.msra.mxu0 0.0
      %807 = vmatprep.subr.mxu0 0.0
      %808 = vmatpush1.msra.mxu0 0.0
      %809 = vmatprep.subr.mxu0 0.0
      %810 = vmatpush1.msra.mxu0 0.0
      %811 = vmatprep.subr.mxu0 0.0
      %812 = vmatpush1.msra.mxu0 0.0
      %813 = vmatprep.subr.mxu0 0.0
      %814 = vmatpush1.msra.mxu0 0.0
      %815 = vmatprep.subr.mxu0 0.0
      %816 = vmatpush1.msra.mxu0 0.0
      %817 = vmatprep.subr.mxu0 0.0
      %818 = vmatpush1.msra.mxu0 0.0
      %819 = vmatprep.subr.mxu0 0.0
      %820 = vmatpush1.msra.mxu0 0.0
      %821 = vmatprep.subr.mxu0 0.0
      %822 = vmatpush1.msra.mxu0 0.0
      %823 = vmatprep.subr.mxu0 0.0
      %824 = vmatpush1.msra.mxu0 0.0
      %825 = vmatprep.subr.mxu0 0.0
      %826 = vmatpush1.msra.mxu0 0.0
      %827 = vmatprep.subr.mxu0 0.0
      %828 = vmatpush1.msra.mxu0 0.0
      %829 = vmatprep.subr.mxu0 0.0
      %830 = vmatpush1.msra.mxu0 0.0
      %831 = vmatprep.subr.mxu0 0.0
      %832 = vmatpush1.msra.mxu0 0.0
      %833 = vmatprep.subr.mxu0 0.0
      %834 = vmatpush1.msra.mxu0 0.0
      %835 = vmatprep.subr.mxu0 0.0
      %836 = vmatpush1.msra.mxu0 0.0
      %837 = vmatprep.subr.mxu0 0.0
      %838 = vmatpush1.msra.mxu0 0.0
      %839 = vmatprep.subr.mxu0 0.0
      %840 = vmatpush1.msra.mxu0 0.0
      %841 = vmatprep.mubr.f32.mxu0 0.0
      %842 = vmatmul.mubr.f32.gmra.mrb[0].mxu0 %v677
      %v843 = vpop.f32.mrb[0].mxu0
      %v844 = vadd.f32 0.0, %v843
      %v845 = vpop.f32.mrb[0].mxu0
      %v846 = vadd.f32 0.0, %v845
      %847 = vmatprep.mubr.f32.mxu0 0.0
      %848 = vmatmul.mubr.f32.gmra.mrb[0].mxu0 %v680
      %v849 = vpop.f32.mrb[0].mxu0
      %v850 = vadd.f32 0.0, %v849
      %v851 = vpop.f32.mrb[0].mxu0
      %v852 = vadd.f32 0.0, %v851
      %853 = vmatprep.mubr.f32.mxu0 0.0
      %854 = vmatmul.mubr.f32.gmra.mrb[0].mxu0 %v683
      %v855 = vpop.f32.mrb[0].mxu0
      %v856 = vadd.f32 0.0, %v855
      %v857 = vpop.f32.mrb[0].mxu0
      %v858 = vadd.f32 0.0, %v857
      %859 = vmatprep.mubr.f32.mxu0 0.0
      %860 = vmatmul.mubr.f32.gmra.mrb[0].mxu0 %v686
      %v861 = vpop.f32.mrb[0].mxu0
      %v862 = vadd.f32 0.0, %v861
      %v863 = vpop.f32.mrb[0].mxu0
      %v864 = vadd.f32 0.0, %v863
      %865 = vdwg.mxu0
      %866 = vmatprep.subr.mxu0 %v669
      %867 = vmatpush1.msra.mxu0 %v668
      %868 = vmatprep.subr.mxu0 %v671
      %869 = vmatpush1.msra.mxu0 %v670
      %870 = vmatprep.subr.mxu0 %v673
      %871 = vmatpush1.msra.mxu0 %v672
      %872 = vmatprep.subr.mxu0 %v675
      %873 = vmatpush1.msra.mxu0 %v674
      %874 = vmatprep.subr.mxu0 0.0
      %875 = vmatpush1.msra.mxu0 0.0
      %876 = vmatprep.subr.mxu0 0.0
      %877 = vmatpush1.msra.mxu0 0.0
      %878 = vmatprep.subr.mxu0 0.0
      %879 = vmatpush1.msra.mxu0 0.0
      %880 = vmatprep.subr.mxu0 0.0
      %881 = vmatpush1.msra.mxu0 0.0
      %882 = vmatprep.subr.mxu0 0.0
      %883 = vmatpush1.msra.mxu0 0.0
      %884 = vmatprep.subr.mxu0 0.0
      %885 = vmatpush1.msra.mxu0 0.0
      %886 = vmatprep.subr.mxu0 0.0
      %887 = vmatpush1.msra.mxu0 0.0
      %888 = vmatprep.subr.mxu0 0.0
      %889 = vmatpush1.msra.mxu0 0.0
      %890 = vmatprep.subr.mxu0 0.0
      %891 = vmatpush1.msra.mxu0 0.0
      %892 = vmatprep.subr.mxu0 0.0
      %893 = vmatpush1.msra.mxu0 0.0
      %894 = vmatprep.subr.mxu0 0.0
      %895 = vmatpush1.msra.mxu0 0.0
      %896 = vmatprep.subr.mxu0 0.0
      %897 = vmatpush1.msra.mxu0 0.0
      %898 = vmatprep.subr.mxu0 0.0
      %899 = vmatpush1.msra.mxu0 0.0
      %900 = vmatprep.subr.mxu0 0.0
      %901 = vmatpush1.msra.mxu0 0.0
      %902 = vmatprep.subr.mxu0 0.0
      %903 = vmatpush1.msra.mxu0 0.0
      %904 = vmatprep.subr.mxu0 0.0
      %905 = vmatpush1.msra.mxu0 0.0
      %906 = vmatprep.subr.mxu0 0.0
      %907 = vmatpush1.msra.mxu0 0.0
      %908 = vmatprep.subr.mxu0 0.0
      %909 = vmatpush1.msra.mxu0 0.0
      %910 = vmatprep.subr.mxu0 0.0
      %911 = vmatpush1.msra.mxu0 0.0
      %912 = vmatprep.subr.mxu0 0.0
      %913 = vmatpush1.msra.mxu0 0.0
      %914 = vmatprep.subr.mxu0 0.0
      %915 = vmatpush1.msra.mxu0 0.0
      %916 = vmatprep.subr.mxu0 0.0
      %917 = vmatpush1.msra.mxu0 0.0
      %918 = vmatprep.subr.mxu0 0.0
      %919 = vmatpush1.msra.mxu0 0.0
      %920 = vmatprep.subr.mxu0 0.0
      %921 = vmatpush1.msra.mxu0 0.0
      %922 = vmatprep.subr.mxu0 0.0
      %923 = vmatpush1.msra.mxu0 0.0
      %924 = vmatprep.subr.mxu0 0.0
      %925 = vmatpush1.msra.mxu0 0.0
      %926 = vmatprep.subr.mxu0 0.0
      %927 = vmatpush1.msra.mxu0 0.0
      %928 = vmatprep.subr.mxu0 0.0
      %929 = vmatpush1.msra.mxu0 0.0
      %930 = vmatprep.mubr.f32.mxu0 0.0
      %931 = vmatmul.mubr.f32.gmra.mrb[0].mxu0 %v677
      %v932 = vpop.f32.mrb[0].mxu0
      %v933 = vadd.f32 0.0, %v932
      %v934 = vpop.f32.mrb[0].mxu0
      %v935 = vadd.f32 0.0, %v934
      %936 = vmatprep.mubr.f32.mxu0 0.0
      %937 = vmatmul.mubr.f32.gmra.mrb[0].mxu0 %v680
      %v938 = vpop.f32.mrb[0].mxu0
      %v939 = vadd.f32 0.0, %v938
      %v940 = vpop.f32.mrb[0].mxu0
      %v941 = vadd.f32 0.0, %v940
      %942 = vmatprep.mubr.f32.mxu0 0.0
      %943 = vmatmul.mubr.f32.gmra.mrb[0].mxu0 %v683
      %v944 = vpop.f32.mrb[0].mxu0
      %v945 = vadd.f32 0.0, %v944
      %v946 = vpop.f32.mrb[0].mxu0
      %v947 = vadd.f32 0.0, %v946
      %948 = vmatprep.mubr.f32.mxu0 0.0
      %949 = vmatmul.mubr.f32.gmra.mrb[0].mxu0 %v686
      %v950 = vpop.f32.mrb[0].mxu0
      %v951 = vadd.f32 0.0, %v950
      %v952 = vpop.f32.mrb[0].mxu0
      %v953 = vadd.f32 0.0, %v952
      %954 = vdwg.mxu0
      %955 = vst [vmem:[%s249] sm:$0xff] %v307
      %956 = vst [vmem:[%s249 + $0x8] sm:$0xff] %v308
      %957 = vst [vmem:[%s249 + $0x10] sm:$0xff] %v309
      %958 = vst [vmem:[%s249 + $0x18] sm:$0xff] %v310
      %959 = vst [vmem:[%s249 + $0x20] sm:$0xff] %v311
      %960 = vst [vmem:[%s249 + $0x28] sm:$0xff] %v312
      %961 = vst [vmem:[%s249 + $0x30] sm:$0xff] %v313
      %962 = vst [vmem:[%s249 + $0x38] sm:$0xff] %v314
      %963 = vst [vmem:[%s249 + $0x40] sm:$0xff] %v755
      %964 = vst [vmem:[%s249 + $0x48] sm:$0xff] %v757
      %965 = vst [vmem:[%s249 + $0x50] sm:$0xff] %v761
      %966 = vst [vmem:[%s249 + $0x58] sm:$0xff] %v763
      %967 = vst [vmem:[%s249 + $0x60] sm:$0xff] %v767
      %968 = vst [vmem:[%s249 + $0x68] sm:$0xff] %v769
      %969 = vst [vmem:[%s249 + $0x70] sm:$0xff] %v773
      %970 = vst [vmem:[%s249 + $0x78] sm:$0xff] %v775
      %v971 = vsub.f32 %v307, %v479
      %v972 = vsub.f32 %v308, %v480
      %v973 = vsub.f32 %v309, %v481
      %v974 = vsub.f32 %v310, %v482
      %v975 = vsub.f32 %v311, %v483
      %v976 = vsub.f32 %v312, %v484
      %v977 = vsub.f32 %v313, %v485
      %v978 = vsub.f32 %v314, %v486
      %v979 = vmul.f32 %v971, %v971
      %v980 = vmul.f32 %v972, %v972
      %v981 = vmul.f32 %v973, %v973
      %v982 = vmul.f32 %v974, %v974
      %v983 = vmul.f32 %v975, %v975
      %v984 = vmul.f32 %v976, %v976
      %v985 = vmul.f32 %v977, %v977
      %v986 = vmul.f32 %v978, %v978
      %v987 = vadd.f32 %v979, %v981
      %v988 = vadd.f32 %v987, %v983
      %v989 = vadd.f32 %v988, %v985
      %v990 = vrot.slane %v989, 4
      %v991 = vadd.f32 %v989, %v990
      %v992 = vrot.slane %v991, 2
      %v993 = vadd.f32 %v991, %v992
      %v994 = vrot.slane %v993, 1
      %v995 = vadd.f32 %v993, %v994
      %v996 = vadd.f32 %v980, %v982
      %v997 = vadd.f32 %v996, %v984
      %v998 = vadd.f32 %v997, %v986
      %v999 = vrot.slane %v998, 4
      %v1000 = vadd.f32 %v998, %v999
      %v1001 = vrot.slane %v1000, 2
      %v1002 = vadd.f32 %v1000, %v1001
      %v1003 = vrot.slane %v1002, 1
      %v1004 = vadd.f32 %v1002, %v1003
      %v1005 = vsub.f32 %v307, %v844
      %v1006 = vsub.f32 %v308, %v846
      %v1007 = vsub.f32 %v309, %v850
      %v1008 = vsub.f32 %v310, %v852
      %v1009 = vsub.f32 %v311, %v856
      %v1010 = vsub.f32 %v312, %v858
      %v1011 = vsub.f32 %v313, %v862
      %v1012 = vsub.f32 %v314, %v864
      %v1013 = vadd.f32 %v1005, 1e-06
      %v1014 = vadd.f32 %v1006, 1e-06
      %v1015 = vadd.f32 %v1007, 1e-06
      %v1016 = vadd.f32 %v1008, 1e-06
      %v1017 = vadd.f32 %v1009, 1e-06
      %v1018 = vadd.f32 %v1010, 1e-06
      %v1019 = vadd.f32 %v1011, 1e-06
      %v1020 = vadd.f32 %v1012, 1e-06
      %v1021 = vmul.f32 %v1013, %v1013
      %v1022 = vmul.f32 %v1014, %v1014
      %v1023 = vmul.f32 %v1015, %v1015
      %v1024 = vmul.f32 %v1016, %v1016
      %v1025 = vmul.f32 %v1017, %v1017
      %v1026 = vmul.f32 %v1018, %v1018
      %v1027 = vmul.f32 %v1019, %v1019
      %v1028 = vmul.f32 %v1020, %v1020
      %v1029 = vadd.f32 %v1021, %v1023
      %v1030 = vadd.f32 %v1029, %v1025
      %v1031 = vadd.f32 %v1030, %v1027
      %v1032 = vrot.slane %v1031, 4
      %v1033 = vadd.f32 %v1031, %v1032
      %v1034 = vrot.slane %v1033, 2
      %v1035 = vadd.f32 %v1033, %v1034
      %v1036 = vrot.slane %v1035, 1
      %v1037 = vadd.f32 %v1035, %v1036
      %v1038 = vadd.f32 %v1022, %v1024
      %v1039 = vadd.f32 %v1038, %v1026
      %v1040 = vadd.f32 %v1039, %v1028
      %v1041 = vrot.slane %v1040, 4
      %v1042 = vadd.f32 %v1040, %v1041
      %v1043 = vrot.slane %v1042, 2
      %v1044 = vadd.f32 %v1042, %v1043
      %v1045 = vrot.slane %v1044, 1
      %v1046 = vadd.f32 %v1044, %v1045
      %v1047 = vrsqrt.pop %v1037
      %v1048 = vmul.f32 %v1037, %v1047
      %vm1049 = vcmp.eq.f32.partialorder %v1037, inf
      %v1050 = vsel %vm1049, %v1037, %v1048
      %vm1051 = vcmp.eq.f32.partialorder %v1037, 0.0
      %v1052 = vand.u32 %v1037, 2147483648
      %v1053 = vsel %vm1051, %v1052, %v1050
      %v1054 = vrsqrt.pop %v1046
      %v1055 = vmul.f32 %v1046, %v1054
      %vm1056 = vcmp.eq.f32.partialorder %v1046, inf
      %v1057 = vsel %vm1056, %v1046, %v1055
      %vm1058 = vcmp.eq.f32.partialorder %v1046, 0.0
      %v1059 = vand.u32 %v1046, 2147483648
      %v1060 = vsel %vm1058, %v1059, %v1057
      %v1061 = vsub.f32 %v307, %v933
      %v1062 = vsub.f32 %v308, %v935
      %v1063 = vsub.f32 %v309, %v939
      %v1064 = vsub.f32 %v310, %v941
      %v1065 = vsub.f32 %v311, %v945
      %v1066 = vsub.f32 %v312, %v947
      %v1067 = vsub.f32 %v313, %v951
      %v1068 = vsub.f32 %v314, %v953
      %v1069 = vadd.f32 %v1061, 1e-06
      %v1070 = vadd.f32 %v1062, 1e-06
      %v1071 = vadd.f32 %v1063, 1e-06
      %v1072 = vadd.f32 %v1064, 1e-06
      %v1073 = vadd.f32 %v1065, 1e-06
      %v1074 = vadd.f32 %v1066, 1e-06
      %v1075 = vadd.f32 %v1067, 1e-06
      %v1076 = vadd.f32 %v1068, 1e-06
      %v1077 = vmul.f32 %v1069, %v1069
      %v1078 = vmul.f32 %v1070, %v1070
      %v1079 = vmul.f32 %v1071, %v1071
      %v1080 = vmul.f32 %v1072, %v1072
      %v1081 = vmul.f32 %v1073, %v1073
      %v1082 = vmul.f32 %v1074, %v1074
      %v1083 = vmul.f32 %v1075, %v1075
      %v1084 = vmul.f32 %v1076, %v1076
      %v1085 = vadd.f32 %v1077, %v1079
      %v1086 = vadd.f32 %v1085, %v1081
      %v1087 = vadd.f32 %v1086, %v1083
      %v1088 = vrot.slane %v1087, 4
      %v1089 = vadd.f32 %v1087, %v1088
      %v1090 = vrot.slane %v1089, 2
      %v1091 = vadd.f32 %v1089, %v1090
      %v1092 = vrot.slane %v1091, 1
      %v1093 = vadd.f32 %v1091, %v1092
      %v1094 = vadd.f32 %v1078, %v1080
      %v1095 = vadd.f32 %v1094, %v1082
      %v1096 = vadd.f32 %v1095, %v1084
      %v1097 = vrot.slane %v1096, 4
      %v1098 = vadd.f32 %v1096, %v1097
      %v1099 = vrot.slane %v1098, 2
      %v1100 = vadd.f32 %v1098, %v1099
      %v1101 = vrot.slane %v1100, 1
      %v1102 = vadd.f32 %v1100, %v1101
      %v1103 = vrsqrt.pop %v1093
      %v1104 = vmul.f32 %v1093, %v1103
      %vm1105 = vcmp.eq.f32.partialorder %v1093, inf
      %v1106 = vsel %vm1105, %v1093, %v1104
      %vm1107 = vcmp.eq.f32.partialorder %v1093, 0.0
      %v1108 = vand.u32 %v1093, 2147483648
      %v1109 = vsel %vm1107, %v1108, %v1106
      %v1110 = vrsqrt.pop %v1102
      %v1111 = vmul.f32 %v1102, %v1110
      %vm1112 = vcmp.eq.f32.partialorder %v1102, inf
      %v1113 = vsel %vm1112, %v1102, %v1111
      %vm1114 = vcmp.eq.f32.partialorder %v1102, 0.0
      %v1115 = vand.u32 %v1102, 2147483648
      %v1116 = vsel %vm1114, %v1115, %v1113
      %v1117 = vsub.f32 %v1053, %v1109
      %v1118 = vsub.f32 %v1060, %v1116
      %v1119 = vadd.f32 %v1117, 1.0
      %v1120 = vadd.f32 %v1118, 1.0
      %v1121 = vmax.f32 %v1119, 0.0
      %v1122 = vmax.f32 %v1120, 0.0
      %vm1123 = vcmask 1040384
      %v1124 = vsel %vm1123, %v995, %v1121
      %v1125 = vsel %vm1123, %v1004, %v1122
      %v1128 = vcombine.low %v1124, %v1125
      %v1130 = vunpack.c.l.s4 1983009808
      %v1131 = vunpack.c.0.s8 %v1130
      %v1132 = vlaneseq
      %v1133 = vshrl.u32 %v1132, 7
      %v1134 = vsub.s32 %v1131, %v1133
      %v1135 = vrot.slane %v1128, %v1134
      %1137 = vst [vmem:[%s259] sm:$0xf] %v1135
      %s1138 = smul.u32 2, %s21
      %p1139 = scmp.lt.s32.totalorder %s20, 1
      %s1140 = scalar_select %p1139, %s20, 1
      %p1141 = scmp.lt.s32.totalorder %s1138, 1
      %s1142 = scalar_select %p1141, %s1138, 1
      %s1143 = smul.addr %s1140, 16
      %s1144 = sadd.s32 %s1142, %s1143
      %s1145 = smul.addr %s1144, 8
      %s1146 = scalar_lea.vmem %s3, %s1145
      %s1147 = smul.u32 2, %s21
      %p1148 = scmp.lt.s32.totalorder %s20, 1
      %s1149 = scalar_select %p1148, %s20, 1
      %p1150 = scmp.lt.s32.totalorder %s1147, 1
      %s1151 = scalar_select %p1150, %s1147, 1
      %s1152 = smul.addr %s1149, 2
      %s1153 = sadd.s32 %s1151, %s1152
      %s1154 = smul.addr %s1153, 2
      %s1155 = scalar_lea.vmem %s4, %s1154
      // Predicated region
      $region33: #{mem_module_forward.1} parent=31 // pred_check
        %p1156 = pneg %p118
      $region34: #{mem_module_forward.1} parent=31 // pred_check_branch
        %1158 = sbr.rel (%p1156) target = $region36
      $region35: #{mem_module_forward.1} parent=31 // pred_region
        %s1159 = smul.u32 2, %s21
      $region36: #{mem_module_forward.1} parent=31 // pred_fallthru
        _
      // Predicated region
      $region37: #{mem_module_forward.1} parent=31 // pred_check
        %p1160 = pneg %p146
      $region38: #{mem_module_forward.1} parent=31 // pred_check_branch
        %1162 = sbr.rel (%p1160) target = $region40
      $region39: #{mem_module_forward.1} parent=31 // pred_region
        %s1163 = smul.u32 2, %s21
      $region40: #{mem_module_forward.1} parent=31 // pred_fallthru
        _
    $region32: #{mem_module_forward.1} parent=5 // pred_fallthru
      _
    %p1164 = scmp.le.s32.totalorder 2, %s11
    // Predicated region
    $region41: #{mem_module_forward.1} parent=5 // pred_check
      %p1165 = pneg %p1164
    $region42: #{mem_module_forward.1} parent=5 // pred_check_branch
      %1167 = sbr.rel (%p1165) target = $region44
    $region43: #{mem_module_forward.1} parent=5 // pred_region
      %s1168 = ssub.s32 %s11, 2
      // Predicated region
      $region45: #{mem_module_forward.1} parent=43 // pred_check
        %p1169 = pneg %p124
      $region46: #{mem_module_forward.1} parent=43 // pred_check_branch
        %1171 = sbr.rel (%p1169) target = $region48
      $region47: #{mem_module_forward.1} parent=43 // pred_region
        %s1172 = smul.u32 2, %s23
        %p1173 = scmp.lt.s32.totalorder %s22, 1
        %s1174 = scalar_select %p1173, %s22, 1
        %p1175 = scmp.lt.s32.totalorder %s1172, 1
        %s1176 = scalar_select %p1175, %s1172, 1
        %s1177 = smul.addr %s1174, 16
        %s1178 = sadd.s32 %s1176, %s1177
        %s1179 = smul.addr %s1178, 8
        %s1180 = scalar_lea.vmem %s3, %s1179
      $region48: #{mem_module_forward.1} parent=43 // pred_fallthru
        _
      // Predicated region
      $region49: #{mem_module_forward.1} parent=43 // pred_check
        %p1181 = pneg %p152
      $region50: #{mem_module_forward.1} parent=43 // pred_check_branch
        %1183 = sbr.rel (%p1181) target = $region52
      $region51: #{mem_module_forward.1} parent=43 // pred_region
        %s1184 = smul.u32 2, %s23
        %p1185 = scmp.lt.s32.totalorder %s22, 1
        %s1186 = scalar_select %p1185, %s22, 1
        %p1187 = scmp.lt.s32.totalorder %s1184, 1
        %s1188 = scalar_select %p1187, %s1184, 1
        %s1189 = smul.addr %s1186, 2
        %s1190 = sadd.s32 %s1188, %s1189
        %s1191 = smul.addr %s1190, 2
        %s1192 = scalar_lea.vmem %s4, %s1191
      $region52: #{mem_module_forward.1} parent=43 // pred_fallthru
        _
    $region44: #{mem_module_forward.1} parent=5 // pred_fallthru
      _
  $region6: #{mem_module_forward.1} parent=0 // loop_footer
    %s15 = sadd.s32 1, %s11
  $region7: #{mem_module_forward.1} parent=0 // loop_footer_branch
    %10 = sbr.rel target = $region3
  $region8: #{mem_module_forward.1} parent=0 // loop_exit
    _

</llo_original>
